<compile_context>
chip_gen: v7x
topology: tpu7x:2x2x1
jax: 0.10.0
libtpu: 0.0.40
codegen_flags: <defaults>
</compile_context>

<pallas_src>
import jax
import jax.numpy as jnp
from jax import lax
from jax.experimental import pallas as pl
from jax.experimental.pallas import tpu as pltpu


def _round_up(x, m):
    return ((x + m - 1) // m) * m


def fnn_kernel(x_ref, w1_ref, b1_ref, w2_ref, b2_ref, w3_ref, b3_ref, o_ref):
    # Layer 1: cast f32 x tile to bf16 in-kernel (VPU), (TB, 200) @ (200, 256)
    # on the MXU with f32 accumulation. K=200 is handled by Mosaic directly.
    x_bf = x_ref[...].astype(jnp.bfloat16)
    h1 = jnp.dot(x_bf, w1_ref[...], preferred_element_type=jnp.float32)
    h1 = jnp.maximum(h1 + b1_ref[...], 0.0)          # bias/ReLU in f32 (VPU)

    # Dropout(0.5): identity (eval mode).

    # Layer 2: (TB, 256) bf16 @ (256, 128) bf16 on the MXU, f32 accumulation.
    h2 = jnp.dot(h1.astype(jnp.bfloat16), w2_ref[...],
                 preferred_element_type=jnp.float32)
    h2 = jnp.maximum(h2 + b2_ref[...], 0.0)

    # Layer 3: Linear(128 -> 1) computed lane-dense as (1,128) @ (TB,128)^T
    # -> (1, TB) on the MXU (K=128 reduction), so bias-add + sigmoid run at
    # full lane width and the output store is an unmasked, lane-dense vst.
    h3 = lax.dot_general(w3_ref[...], h2.astype(jnp.bfloat16),
                         dimension_numbers=(((1,), (1,)), ((), ())),
                         preferred_element_type=jnp.float32)
    h3 = h3 + b3_ref[0]                               # scalar bias from SMEM
    o_ref[...] = jax.nn.sigmoid(h3).astype(o_ref.dtype)


def fnn_forward(x, w1, b1, w2, b2, w3, b3):
    """x: (B, 200) f32; w* stored as (in, out); b* as (1, out). Returns (B, 1) f32."""
    B = x.shape[0]

    # Batch tile: large enough to amortize per-grid-step overhead, small enough
    # to give v7x's 2 TensorCores several tiles each; tiny batches don't over-pad.
    if B < 512:
        TB = _round_up(max(B, 8), 8)
    else:
        TB = min(2048, _round_up(pl.cdiv(B, 8), 256))
    B_pad = _round_up(B, TB)
    grid = (B_pad // TB,)

    # x stays f32 and unpadded in K; only zero-pad the batch dim when needed.
    x_p = x if B_pad == B else jnp.pad(x, ((0, B_pad - B), (0, 0)))

    # Weights cast to bf16 once in the wrapper (tiny, one-time).
    w1_b = w1.astype(jnp.bfloat16)                    # (200, 256)
    w2_b = w2.astype(jnp.bfloat16)                    # (256, 128)
    w3_b = w3.reshape(1, 128).astype(jnp.bfloat16)    # (1, 128)
    b3_s = b3.reshape(-1).astype(jnp.float32)         # (1,) scalar -> SMEM

    const = lambda shape: pl.BlockSpec(shape, lambda i: (0, 0))

    out = pl.pallas_call(
        fnn_kernel,
        out_shape=jax.ShapeDtypeStruct((1, B_pad), jnp.float32),
        grid=grid,
        in_specs=[
            pl.BlockSpec((TB, 200), lambda i: (i, 0)),          # x: f32, tiled over batch
            const((200, 256)),                                   # w1: resident in VMEM
            const((1, 256)),                                     # b1
            const((256, 128)),                                   # w2
            const((1, 128)),                                     # b2
            const((1, 128)),                                     # w3 (as a row)
            pl.BlockSpec(memory_space=pltpu.MemorySpace.SMEM),   # b3 scalar
        ],
        out_specs=pl.BlockSpec((1, TB), lambda i: (0, i)),       # lane-dense output
        compiler_params=pltpu.CompilerParams(
            dimension_semantics=("parallel",),     # shard batch tiles on v7x's 2 TCs
        ),
    )(x_p, w1_b, b1, w2_b, b2, w3_b, b3_s)

    return out[0, :B].reshape(B, 1)


def init_linear(key, in_f, out_f):
    # Mimics PyTorch nn.Linear default init: U(-1/sqrt(in_f), 1/sqrt(in_f)).
    kw, kb = jax.random.split(key)
    bound = 1.0 / jnp.sqrt(jnp.float32(in_f))
    w = jax.random.uniform(kw, (in_f, out_f), jnp.float32, -bound, bound)  # (in, out)
    b = jax.random.uniform(kb, (1, out_f), jnp.float32, -bound, bound)
    return w, b


def reference_bf16(x, w1, b1, w2, b2, w3, b3):
    # Plain-JAX reference with the same mixed-precision recipe as the kernel.
    h1 = jnp.dot(x.astype(jnp.bfloat16), w1.astype(jnp.bfloat16),
                 preferred_element_type=jnp.float32) + b1
    h1 = jnp.maximum(h1, 0.0)
    h2 = jnp.dot(h1.astype(jnp.bfloat16), w2.astype(jnp.bfloat16),
                 preferred_element_type=jnp.float32) + b2
    h2 = jnp.maximum(h2, 0.0)
    h3 = jnp.dot(h2.astype(jnp.bfloat16), w3.astype(jnp.bfloat16),
                 preferred_element_type=jnp.float32) + b3
    return jax.nn.sigmoid(h3)


def reference_f32(x, w1, b1, w2, b2, w3, b3):
    h1 = jnp.maximum(x @ w1 + b1, 0.0)
    h2 = jnp.maximum(h1 @ w2 + b2, 0.0)
    return jax.nn.sigmoid(h2 @ w3 + b3)


if __name__ == "__main__":
    key = jax.random.PRNGKey(0)
    kx, k1, k2, k3 = jax.random.split(key, 4)

    B = 8
    x = jax.random.normal(kx, (B, 200), jnp.float32)

    w1, b1 = init_linear(k1, 200, 256)
    w2, b2 = init_linear(k2, 256, 128)
    w3, b3 = init_linear(k3, 128, 1)

    out = fnn_forward(x, w1, b1, w2, b2, w3, b3)
    out = jax.block_until_ready(out)
    assert out.shape == (B, 1)

    # Same-precision reference (tight) and full-f32 reference (loose, bf16 weights).
    ref_bf16 = reference_bf16(x, w1, b1, w2, b2, w3, b3)
    ref_f32 = reference_f32(x, w1, b1, w2, b2, w3, b3)
    assert jnp.allclose(out, ref_bf16, atol=2e-3, rtol=2e-3)
    assert jnp.allclose(out, ref_f32, atol=5e-2, rtol=5e-2)

    print("KERNEL_OK")
</pallas_src>

<mosaic_0001>
module attributes {stable_mosaic.version = 11 : i64} {
  func.func @fnn_kernel(%arg0: i32, %arg1: memref<8x200xf32, #tpu.memory_space<vmem>>, %arg2: memref<200x256xbf16, #tpu.memory_space<vmem>>, %arg3: memref<1x256xf32, #tpu.memory_space<vmem>>, %arg4: memref<256x128xbf16, #tpu.memory_space<vmem>>, %arg5: memref<1x128xf32, #tpu.memory_space<vmem>>, %arg6: memref<1x128xbf16, #tpu.memory_space<vmem>>, %arg7: memref<1xf32, #tpu.memory_space<smem>>, %arg8: memref<1x8xf32, #tpu.memory_space<vmem>>) attributes {dimension_semantics = [#tpu.dimension_semantics<parallel>], iteration_bounds = array<i64: 1>, scalar_prefetch = 0 : i64, scratch_operands = 0 : i64, tpu.core_type = #tpu.core_type<tc>, window_params = [{transform_indices = @transform_0, window_bounds = array<i64: 8, 200>}, {pipeline_mode = #tpu.pipeline_mode<synchronous>, transform_indices = @transform_1, window_bounds = array<i64: 200, 256>}, {pipeline_mode = #tpu.pipeline_mode<synchronous>, transform_indices = @transform_2, window_bounds = array<i64: 1, 256>}, {pipeline_mode = #tpu.pipeline_mode<synchronous>, transform_indices = @transform_3, window_bounds = array<i64: 256, 128>}, {pipeline_mode = #tpu.pipeline_mode<synchronous>, transform_indices = @transform_4, window_bounds = array<i64: 1, 128>}, {pipeline_mode = #tpu.pipeline_mode<synchronous>, transform_indices = @transform_5, window_bounds = array<i64: 1, 128>}, {transform_indices = @transform_6, window_bounds = array<i64: 1>}, {transform_indices = @transform_7, window_bounds = array<i64: 1, 8>}]} {
    %c0 = arith.constant 0 : index
    %c0_0 = arith.constant 0 : index
    %0 = vector.load %arg1[%c0, %c0_0] : memref<8x200xf32, #tpu.memory_space<vmem>>, vector<8x200xf32>
    %1 = arith.truncf %0 : vector<8x200xf32> to vector<8x200xbf16>
    %c0_1 = arith.constant 0 : index
    %c0_2 = arith.constant 0 : index
    %2 = vector.load %arg2[%c0_1, %c0_2] : memref<200x256xbf16, #tpu.memory_space<vmem>>, vector<200x256xbf16>
    %cst = arith.constant dense<0.000000e+00> : vector<8x256xf32>
    %3 = tpu.matmul %1, %2, %cst {dimension_numbers = #tpu.dot_dimension_numbers<[1], [0], [0], [1], [0, 0, 1, 1], [], []>} : vector<8x200xbf16>, vector<200x256xbf16>, vector<8x256xf32> -> vector<8x256xf32>
    %c0_3 = arith.constant 0 : index
    %c0_4 = arith.constant 0 : index
    %4 = vector.load %arg3[%c0_3, %c0_4] : memref<1x256xf32, #tpu.memory_space<vmem>>, vector<1x256xf32>
    %5 = vector.broadcast %4 : vector<1x256xf32> to vector<8x256xf32>
    %6 = arith.addf %3, %5 : vector<8x256xf32>
    %cst_5 = arith.constant 0.000000e+00 : f32
    %7 = vector.broadcast %cst_5 : f32 to vector<8x256xf32>
    %8 = arith.maximumf %6, %7 : vector<8x256xf32>
    %9 = arith.truncf %8 : vector<8x256xf32> to vector<8x256xbf16>
    %c0_6 = arith.constant 0 : index
    %c0_7 = arith.constant 0 : index
    %10 = vector.load %arg4[%c0_6, %c0_7] : memref<256x128xbf16, #tpu.memory_space<vmem>>, vector<256x128xbf16>
    %cst_8 = arith.constant dense<0.000000e+00> : vector<8x128xf32>
    %11 = tpu.matmul %9, %10, %cst_8 {dimension_numbers = #tpu.dot_dimension_numbers<[1], [0], [0], [1], [0, 0, 1, 1], [], []>} : vector<8x256xbf16>, vector<256x128xbf16>, vector<8x128xf32> -> vector<8x128xf32>
    %c0_9 = arith.constant 0 : index
    %c0_10 = arith.constant 0 : index
    %12 = vector.load %arg5[%c0_9, %c0_10] : memref<1x128xf32, #tpu.memory_space<vmem>>, vector<1x128xf32>
    %13 = vector.broadcast %12 : vector<1x128xf32> to vector<8x128xf32>
    %14 = arith.addf %11, %13 : vector<8x128xf32>
    %cst_11 = arith.constant 0.000000e+00 : f32
    %15 = vector.broadcast %cst_11 : f32 to vector<8x128xf32>
    %16 = arith.maximumf %14, %15 : vector<8x128xf32>
    %c0_12 = arith.constant 0 : index
    %c0_13 = arith.constant 0 : index
    %17 = vector.load %arg6[%c0_12, %c0_13] : memref<1x128xbf16, #tpu.memory_space<vmem>>, vector<1x128xbf16>
    %18 = arith.truncf %16 : vector<8x128xf32> to vector<8x128xbf16>
    %cst_14 = arith.constant dense<0.000000e+00> : vector<1x8xf32>
    %19 = tpu.matmul %17, %18, %cst_14 {dimension_numbers = #tpu.dot_dimension_numbers<[1], [1], [0], [0], [0, 0, 1, 0], [], []>} : vector<1x128xbf16>, vector<8x128xbf16>, vector<1x8xf32> -> vector<1x8xf32>
    %c0_15 = arith.constant 0 : index
    %20 = memref.load %arg7[%c0_15] : memref<1xf32, #tpu.memory_space<smem>>
    %21 = vector.broadcast %20 : f32 to vector<1x8xf32>
    %22 = arith.addf %19, %21 : vector<1x8xf32>
    %23 = arith.negf %22 : vector<1x8xf32>
    %24 = math.exp %23 : vector<1x8xf32>
    %cst_16 = arith.constant 1.000000e+00 : f32
    %25 = vector.broadcast %cst_16 : f32 to vector<1x8xf32>
    %26 = arith.addf %25, %24 : vector<1x8xf32>
    %27 = arith.divf %25, %26 : vector<1x8xf32>
    %c0_17 = arith.constant 0 : index
    %c0_18 = arith.constant 0 : index
    %28 = vector.load %arg8[%c0_17, %c0_18] : memref<1x8xf32, #tpu.memory_space<vmem>>, vector<1x8xf32>
    tpu.vector_store %arg8[%c0_17, %c0_18], %27 {strides = array<i32>} : memref<1x8xf32, #tpu.memory_space<vmem>>, vector<1x8xf32>,
    return
  }
  func.func @transform_0(%arg0: i32) -> (i32, i32) {
    %c0_i32 = arith.constant 0 : i32
    %c0_i32_0 = arith.constant 0 : i32
    return %arg0, %c0_i32 : i32, i32
  }
  func.func @transform_1(%arg0: i32) -> (i32, i32) {
    %c0_i32 = arith.constant 0 : i32
    %c0_i32_0 = arith.constant 0 : i32
    %c0_i32_1 = arith.constant 0 : i32
    return %c0_i32, %c0_i32_0 : i32, i32
  }
  func.func @transform_2(%arg0: i32) -> (i32, i32) {
    %c0_i32 = arith.constant 0 : i32
    %c0_i32_0 = arith.constant 0 : i32
    %c0_i32_1 = arith.constant 0 : i32
    return %c0_i32, %c0_i32_0 : i32, i32
  }
  func.func @transform_3(%arg0: i32) -> (i32, i32) {
    %c0_i32 = arith.constant 0 : i32
    %c0_i32_0 = arith.constant 0 : i32
    %c0_i32_1 = arith.constant 0 : i32
    return %c0_i32, %c0_i32_0 : i32, i32
  }
  func.func @transform_4(%arg0: i32) -> (i32, i32) {
    %c0_i32 = arith.constant 0 : i32
    %c0_i32_0 = arith.constant 0 : i32
    %c0_i32_1 = arith.constant 0 : i32
    return %c0_i32, %c0_i32_0 : i32, i32
  }
  func.func @transform_5(%arg0: i32) -> (i32, i32) {
    %c0_i32 = arith.constant 0 : i32
    %c0_i32_0 = arith.constant 0 : i32
    %c0_i32_1 = arith.constant 0 : i32
    return %c0_i32, %c0_i32_0 : i32, i32
  }
  func.func @transform_6(%arg0: i32) -> i32 {
    %c0_i32 = arith.constant 0 : i32
    %c0_i32_0 = arith.constant 0 : i32
    return %c0_i32 : i32
  }
  func.func @transform_7(%arg0: i32) -> (i32, i32) {
    %c0_i32 = arith.constant 0 : i32
    %c0_i32_0 = arith.constant 0 : i32
    return %c0_i32, %arg0 : i32, i32
  }
}

</mosaic_0001>

<llo_original>
// kernel: tpu_custom_call.1
$region0: #{tpu_custom_call.1}
  #allocation0 [shape = 'u32[]', space=smem, size = 0x4, offset = 0x4, fixed_abs, tag = 'smem constant byte address 0x4 - core index']
  #allocation1 [shape = 'u32[144,128]{1,0:T(1,128)}', space=vmem, size = 0x12000, scoped, tag = 'internal scratch']
  #allocation2 [shape = 'f32[1]{0:T(128)S(6)}', space=smem, size = 0x200, scoped, tag = 'scoped memory for tpu_custom_call.1']
  %s0 = inlined_call_operand.hbm [shape: f32[8,200], index: 0, kind: input, shape index: {}]
  %s1 = inlined_call_operand.hbm [shape: bf16[200,256], index: 1, kind: input, shape index: {}]
  %s2 = inlined_call_operand.vmem [shape: f32[1,256], index: 2, kind: input, shape index: {}]
  %s3 = inlined_call_operand.hbm [shape: bf16[256,128], index: 3, kind: input, shape index: {}]
  %s4 = inlined_call_operand.vmem [shape: f32[1,128], index: 4, kind: input, shape index: {}]
  %s5 = inlined_call_operand.vmem [shape: bf16[1,128], index: 5, kind: input, shape index: {}]
  %s6 = inlined_call_operand.<no memory space> [shape: f32[1], index: 6, kind: input, shape index: {}]
  %s7 = inlined_call_operand.hbm [shape: f32[1,8], index: 7, kind: output, shape index: {}]
  %s8 = sld [smem:[#allocation0]]
  $region50: #{tpu_custom_call.1} parent=0
    _
  %s10 = ssub.s32 1, %s8
  %s11 = scalar_select 0, %s10, %s8
  %12 = sst [smem:[#allocation2]] %s6
  $region1: #{tpu_custom_call.1} parent=0
    #allocation3 [shape = 'u8[8192]{0}', space=vmem, size = 0x2000, scoped, tag = 'input window, operand 0, single buffered']
    #allocation4 [shape = 's32[1]{0}', space=sflag, size = 0x4, scoped, tag = 'scoped memory for tpu_custom_call.1']
    #allocation5 [shape = 's32[1]{0}', space=sflag, size = 0x4, scoped, tag = 'scoped memory for tpu_custom_call.1']
    #allocation6 [shape = 'u8[102400]{0}', space=vmem, size = 0x19000, scoped, tag = 'input window, operand 1, single buffered']
    #allocation7 [shape = 's32[1]{0}', space=sflag, size = 0x4, scoped, tag = 'scoped memory for tpu_custom_call.1']
    #allocation8 [shape = 'u8[65536]{0}', space=vmem, size = 0x10000, scoped, tag = 'input window, operand 3, single buffered']
    #allocation9 [shape = 'u8[512]{0}', space=vmem, size = 0x400, scoped, tag = 'output window, operand 0, single buffered']
    %13 = vsyncpa [#allocation4], 0
    %14 = vsyncpa [#allocation7], 0
    %15 = vsyncpa [#allocation5], 0
    // Predicated region
    $region2: #{tpu_custom_call.1} parent=1 // pred_check
      _
    $region3: #{tpu_custom_call.1} parent=1 // pred_check_branch
      %17 = sbr.rel (0) target = $region5
    $region4: #{tpu_custom_call.1} parent=1 // pred_region
      %s19 = ssub.s32 256, 256
      %20 = vsyncadd [#allocation4], %s19
      %s22 = sshll.u32 [#allocation3], 4
      %s23 = int_to_ptr.vmem [resolvable:$true] %s22
      %25 = dma.hbm_to_vmem [thread:$0]  %s0, 256, %s23, [#allocation4]
    $region5: #{tpu_custom_call.1} parent=1 // pred_fallthru
      _
    // Predicated region
    $region6: #{tpu_custom_call.1} parent=1 // pred_check
      _
    $region7: #{tpu_custom_call.1} parent=1 // pred_check_branch
      %27 = sbr.rel (0) target = $region9
    $region8: #{tpu_custom_call.1} parent=1 // pred_region
      %s29 = ssub.s32 3200, 3200
      %30 = vsyncadd [#allocation7], %s29
      %s31 = sshll.u32 [#allocation6], 4
      %s32 = int_to_ptr.vmem [resolvable:$true] %s31
      %37 = dma.hbm_to_vmem [thread:$0]  %s1, 3200, %s32, [#allocation7], 128, 128, 8
    $region9: #{tpu_custom_call.1} parent=1 // pred_fallthru
      _
    // Predicated region
    $region10: #{tpu_custom_call.1} parent=1 // pred_check
      _
    $region11: #{tpu_custom_call.1} parent=1 // pred_check_branch
      %39 = sbr.rel (0) target = $region13
    $region12: #{tpu_custom_call.1} parent=1 // pred_region
      _
    $region13: #{tpu_custom_call.1} parent=1 // pred_fallthru
      _
    // Predicated region
    $region14: #{tpu_custom_call.1} parent=1 // pred_check
      _
    $region15: #{tpu_custom_call.1} parent=1 // pred_check_branch
      %41 = sbr.rel (0) target = $region17
    $region16: #{tpu_custom_call.1} parent=1 // pred_region
      %s43 = ssub.s32 2048, 2048
      %44 = vsyncadd [#allocation7], %s43
      %s45 = sshll.u32 [#allocation8], 4
      %s46 = int_to_ptr.vmem [resolvable:$true] %s45
      %51 = dma.hbm_to_vmem [thread:$0]  %s3, 2048, %s46, [#allocation7], 64, 64, 4
    $region17: #{tpu_custom_call.1} parent=1 // pred_fallthru
      _
    // Predicated region
    $region18: #{tpu_custom_call.1} parent=1 // pred_check
      _
    $region19: #{tpu_custom_call.1} parent=1 // pred_check_branch
      %53 = sbr.rel (0) target = $region21
    $region20: #{tpu_custom_call.1} parent=1 // pred_region
      _
    $region21: #{tpu_custom_call.1} parent=1 // pred_fallthru
      _
    // Predicated region
    $region22: #{tpu_custom_call.1} parent=1 // pred_check
      _
    $region23: #{tpu_custom_call.1} parent=1 // pred_check_branch
      %55 = sbr.rel (0) target = $region25
    $region24: #{tpu_custom_call.1} parent=1 // pred_region
      _
    $region25: #{tpu_custom_call.1} parent=1 // pred_fallthru
      _
    // Predicated region
    $region26: #{tpu_custom_call.1} parent=1 // pred_check
      _
    $region27: #{tpu_custom_call.1} parent=1 // pred_check_branch
      %57 = sbr.rel (0) target = $region29
    $region28: #{tpu_custom_call.1} parent=1 // pred_region
      _
    $region29: #{tpu_custom_call.1} parent=1 // pred_fallthru
      _
    // Predicated region
    $region30: #{tpu_custom_call.1} parent=1 // pred_check
      _
    $region31: #{tpu_custom_call.1} parent=1 // pred_check_branch
      %59 = sbr.rel (0) target = $region33
    $region32: #{tpu_custom_call.1} parent=1 // pred_region
      %60 = dma.done [#allocation4], 256
    $region33: #{tpu_custom_call.1} parent=1 // pred_fallthru
      _
    // Predicated region
    $region34: #{tpu_custom_call.1} parent=1 // pred_check
      _
    $region35: #{tpu_custom_call.1} parent=1 // pred_check_branch
      %62 = sbr.rel (0) target = $region37
    $region36: #{tpu_custom_call.1} parent=1 // pred_region
      %63 = dma.done [#allocation7], 3200
    $region37: #{tpu_custom_call.1} parent=1 // pred_fallthru
      _
    // Predicated region
    $region38: #{tpu_custom_call.1} parent=1 // pred_check
      _
    $region39: #{tpu_custom_call.1} parent=1 // pred_check_branch
      %65 = sbr.rel (0) target = $region41
    $region40: #{tpu_custom_call.1} parent=1 // pred_region
      %66 = dma.done [#allocation7], 2048
    $region41: #{tpu_custom_call.1} parent=1 // pred_fallthru
      _
    %v68 = vld [vmem:[#allocation3] sm:$0xff]
    %v69 = vld [vmem:[#allocation3 + $0x8] sm:$0xff]
    %v70 = vpack.c.bf16 %v68, %v68
    %v71 = vpack.c.bf16 %v69, %v69
    %v72 = vld [vmem:[#allocation6] sm:$0xff]
    %v73 = vld [vmem:[#allocation6 + $0x8] sm:$0xff]
    %v74 = vld [vmem:[#allocation6 + $0x10] sm:$0xff]
    %v75 = vld [vmem:[#allocation6 + $0x18] sm:$0xff]
    %v76 = vld [vmem:[#allocation6 + $0x20] sm:$0xff]
    %v77 = vld [vmem:[#allocation6 + $0x28] sm:$0xff]
    %v78 = vld [vmem:[#allocation6 + $0x30] sm:$0xff]
    %v79 = vld [vmem:[#allocation6 + $0x38] sm:$0xff]
    %v80 = vld [vmem:[#allocation6 + $0x40] sm:$0xff]
    %v81 = vld [vmem:[#allocation6 + $0x48] sm:$0xff]
    %v82 = vld [vmem:[#allocation6 + $0x50] sm:$0xff]
    %v83 = vld [vmem:[#allocation6 + $0x58] sm:$0xff]
    %v84 = vld [vmem:[#allocation6 + $0x60] sm:$0xff]
    %v85 = vld [vmem:[#allocation6 + $0x68] sm:$0xff]
    %v86 = vld [vmem:[#allocation6 + $0x70] sm:$0xff]
    %v87 = vld [vmem:[#allocation6 + $0x78] sm:$0xff]
    %v88 = vld [vmem:[#allocation6 + $0x80] sm:$0xff]
    %v89 = vld [vmem:[#allocation6 + $0x88] sm:$0xff]
    %v90 = vld [vmem:[#allocation6 + $0x90] sm:$0xff]
    %v91 = vld [vmem:[#allocation6 + $0x98] sm:$0xff]
    %v92 = vld [vmem:[#allocation6 + $0xa0] sm:$0xff]
    %v93 = vld [vmem:[#allocation6 + $0xa8] sm:$0xff]
    %v94 = vld [vmem:[#allocation6 + $0xb0] sm:$0xff]
    %v95 = vld [vmem:[#allocation6 + $0xb8] sm:$0xff]
    %v96 = vld [vmem:[#allocation6 + $0xc0] sm:$0xff]
    %v97 = vld [vmem:[%s2] sm:$0x3]
    %v99 = vlaneseq
    %v100 = vshrl.u32 %v99, 7
    %v101 = vsub.s32 0, %v100
    %v102 = vrot.slane %v97, %v101
    %v103 = vlaneseq
    %v104 = vshrl.u32 %v103, 7
    %v105 = vsub.s32 1, %v104
    %v106 = vrot.slane %v97, %v105
    %v134 = vunpack.c.l.b16 %v72
    %v135 = vunpack.c.h.b16 %v72
    %v136 = vunpack.c.l.b16 %v73
    %v137 = vunpack.c.h.b16 %v73
    %v138 = vunpack.c.l.b16 %v74
    %v139 = vunpack.c.h.b16 %v74
    %v140 = vunpack.c.l.b16 %v75
    %v141 = vunpack.c.h.b16 %v75
    %v142 = vunpack.c.l.b16 %v76
    %v143 = vunpack.c.h.b16 %v76
    %v144 = vunpack.c.l.b16 %v77
    %v145 = vunpack.c.h.b16 %v77
    %v146 = vunpack.c.l.b16 %v78
    %v147 = vunpack.c.h.b16 %v78
    %v148 = vunpack.c.l.b16 %v79
    %v149 = vunpack.c.h.b16 %v79
    %v150 = vunpack.c.l.b16 %v80
    %v151 = vunpack.c.h.b16 %v80
    %v152 = vunpack.c.l.b16 %v81
    %v153 = vunpack.c.h.b16 %v81
    %v154 = vunpack.c.l.b16 %v82
    %v155 = vunpack.c.h.b16 %v82
    %v156 = vunpack.c.l.b16 %v83
    %v157 = vunpack.c.h.b16 %v83
    %v158 = vunpack.c.l.b16 %v84
    %v159 = vunpack.c.h.b16 %v84
    %v160 = vunpack.c.l.b16 %v85
    %v161 = vunpack.c.h.b16 %v85
    %v162 = vunpack.c.l.b16 %v86
    %v163 = vunpack.c.h.b16 %v86
    %v164 = vunpack.c.l.b16 %v87
    %v165 = vunpack.c.h.b16 %v87
    %v166 = vunpack.c.l.b16 %v88
    %v167 = vunpack.c.h.b16 %v88
    %v168 = vunpack.c.l.b16 %v89
    %v169 = vunpack.c.h.b16 %v89
    %v170 = vunpack.c.l.b16 %v90
    %v171 = vunpack.c.h.b16 %v90
    %v172 = vunpack.c.l.b16 %v91
    %v173 = vunpack.c.h.b16 %v91
    %v174 = vunpack.c.l.b16 %v92
    %v175 = vunpack.c.h.b16 %v92
    %v176 = vunpack.c.l.b16 %v93
    %v177 = vunpack.c.h.b16 %v93
    %v178 = vunpack.c.l.b16 %v94
    %v179 = vunpack.c.h.b16 %v94
    %v180 = vunpack.c.l.b16 %v95
    %v181 = vunpack.c.h.b16 %v95
    %v182 = vunpack.c.l.b16 %v96
    %v183 = vunpack.c.h.b16 %v96
    %v184 = vpack.c.b16 %v136, %v134
    %v185 = vpack.c.b16 %v137, %v135
    %v186 = vpack.c.b16 %v140, %v138
    %v187 = vpack.c.b16 %v141, %v139
    %v188 = vpack.c.b16 %v144, %v142
    %v189 = vpack.c.b16 %v145, %v143
    %v190 = vpack.c.b16 %v148, %v146
    %v191 = vpack.c.b16 %v149, %v147
    %v192 = vpack.c.b16 %v152, %v150
    %v193 = vpack.c.b16 %v153, %v151
    %v194 = vpack.c.b16 %v156, %v154
    %v195 = vpack.c.b16 %v157, %v155
    %v196 = vpack.c.b16 %v160, %v158
    %v197 = vpack.c.b16 %v161, %v159
    %v198 = vpack.c.b16 %v164, %v162
    %v199 = vpack.c.b16 %v165, %v163
    %v200 = vpack.c.b16 %v168, %v166
    %v201 = vpack.c.b16 %v169, %v167
    %v202 = vpack.c.b16 %v172, %v170
    %v203 = vpack.c.b16 %v173, %v171
    %v204 = vpack.c.b16 %v176, %v174
    %v205 = vpack.c.b16 %v177, %v175
    %v206 = vpack.c.b16 %v180, %v178
    %v207 = vpack.c.b16 %v181, %v179
    %v208 = vpack.c.b16 %v182, %v182
    %v209 = vpack.c.b16 %v183, %v183
    %vm234 = vcmask 588800
    %v236 = vsel %vm234, %v71, 0
    %vm238 = vcmask 1043456
    %v240 = vsel %vm238, %v208, 0
    %v243 = vsel %vm238, %v209, 0
    %245 = vmatprep.subr.bf16.mxu0 %v185
    %246 = vmatpush1.bf16.msra.mxu0 %v184
    %247 = vmatprep.subr.bf16.mxu0 %v187
    %248 = vmatpush1.bf16.msra.mxu0 %v186
    %249 = vmatprep.subr.bf16.mxu0 %v189
    %250 = vmatpush1.bf16.msra.mxu0 %v188
    %251 = vmatprep.subr.bf16.mxu0 %v191
    %252 = vmatpush1.bf16.msra.mxu0 %v190
    %253 = vmatprep.subr.bf16.mxu0 %v193
    %254 = vmatpush1.bf16.msra.mxu0 %v192
    %255 = vmatprep.subr.bf16.mxu0 %v195
    %256 = vmatpush1.bf16.msra.mxu0 %v194
    %257 = vmatprep.subr.bf16.mxu0 %v197
    %258 = vmatpush1.bf16.msra.mxu0 %v196
    %259 = vmatprep.subr.bf16.mxu0 %v199
    %260 = vmatpush1.bf16.msra.mxu0 %v198
    %261 = vmatprep.subr.bf16.mxu0 %v201
    %262 = vmatpush1.bf16.msra.mxu0 %v200
    %263 = vmatprep.subr.bf16.mxu0 %v203
    %264 = vmatpush1.bf16.msra.mxu0 %v202
    %265 = vmatprep.subr.bf16.mxu0 %v205
    %266 = vmatpush1.bf16.msra.mxu0 %v204
    %267 = vmatprep.subr.bf16.mxu0 %v207
    %268 = vmatpush1.bf16.msra.mxu0 %v206
    %269 = vmatprep.subr.bf16.mxu0 %v243
    %270 = vmatpush1.bf16.msra.mxu0 %v240
    %271 = vmatprep.subr.bf16.mxu0 0
    %272 = vmatpush1.bf16.msra.mxu0 0
    %273 = vmatprep.subr.bf16.mxu0 0
    %274 = vmatpush1.bf16.msra.mxu0 0
    %275 = vmatprep.subr.bf16.mxu0 0
    %276 = vmatpush1.bf16.msra.mxu0 0
    %277 = vmatprep.mubr.bf16.mxu0 %v236
    %278 = vmatmul.mubr.bf16.gmra.mrb[0].mxu0 %v70
    %v279 = vpop.f32.mrb[0].mxu0
    %v280 = vadd.f32 %v102, %v279
    %v281 = vpop.f32.mrb[0].mxu0
    %v282 = vadd.f32 %v106, %v281
    %v283 = vpop.f32.mrb[0].mxu0
    %v284 = vpop.f32.mrb[0].mxu0
    %285 = vdwg.mxu0
    %v286 = vmax.f32 %v280, 0.0
    %v287 = vmax.f32 %v282, 0.0
    %v288 = vpack.c.bf16 %v286, %v286
    %v289 = vpack.c.bf16 %v287, %v287
    %v290 = vld [vmem:[#allocation8] sm:$0xf]
    %v291 = vld [vmem:[#allocation8 + $0x4] sm:$0xf]
    %v292 = vld [vmem:[#allocation8 + $0x8] sm:$0xf]
    %v293 = vld [vmem:[#allocation8 + $0xc] sm:$0xf]
    %v294 = vld [vmem:[#allocation8 + $0x10] sm:$0xf]
    %v295 = vld [vmem:[#allocation8 + $0x14] sm:$0xf]
    %v296 = vld [vmem:[#allocation8 + $0x18] sm:$0xf]
    %v297 = vld [vmem:[#allocation8 + $0x1c] sm:$0xf]
    %v298 = vld [vmem:[#allocation8 + $0x20] sm:$0xf]
    %v299 = vld [vmem:[#allocation8 + $0x24] sm:$0xf]
    %v300 = vld [vmem:[#allocation8 + $0x28] sm:$0xf]
    %v301 = vld [vmem:[#allocation8 + $0x2c] sm:$0xf]
    %v302 = vld [vmem:[#allocation8 + $0x30] sm:$0xf]
    %v303 = vld [vmem:[#allocation8 + $0x34] sm:$0xf]
    %v304 = vld [vmem:[#allocation8 + $0x38] sm:$0xf]
    %v305 = vld [vmem:[#allocation8 + $0x3c] sm:$0xf]
    %v306 = vld [vmem:[#allocation8 + $0x40] sm:$0xf]
    %v307 = vld [vmem:[#allocation8 + $0x44] sm:$0xf]
    %v308 = vld [vmem:[#allocation8 + $0x48] sm:$0xf]
    %v309 = vld [vmem:[#allocation8 + $0x4c] sm:$0xf]
    %v310 = vld [vmem:[#allocation8 + $0x50] sm:$0xf]
    %v311 = vld [vmem:[#allocation8 + $0x54] sm:$0xf]
    %v312 = vld [vmem:[#allocation8 + $0x58] sm:$0xf]
    %v313 = vld [vmem:[#allocation8 + $0x5c] sm:$0xf]
    %v314 = vld [vmem:[#allocation8 + $0x60] sm:$0xf]
    %v315 = vld [vmem:[#allocation8 + $0x64] sm:$0xf]
    %v316 = vld [vmem:[#allocation8 + $0x68] sm:$0xf]
    %v317 = vld [vmem:[#allocation8 + $0x6c] sm:$0xf]
    %v318 = vld [vmem:[#allocation8 + $0x70] sm:$0xf]
    %v319 = vld [vmem:[#allocation8 + $0x74] sm:$0xf]
    %v320 = vld [vmem:[#allocation8 + $0x78] sm:$0xf]
    %v321 = vld [vmem:[#allocation8 + $0x7c] sm:$0xf]
    %v322 = vld [vmem:[%s4] sm:$0x1]
    %v324 = vlaneseq
    %v325 = vshrl.u32 %v324, 7
    %v326 = vsub.s32 0, %v325
    %v327 = vrot.slane %v322, %v326
    %v361 = vunpack.c.l.b16 %v290
    %v362 = vunpack.c.l.b16 %v291
    %v363 = vunpack.c.l.b16 %v292
    %v364 = vunpack.c.l.b16 %v293
    %v365 = vunpack.c.l.b16 %v294
    %v366 = vunpack.c.l.b16 %v295
    %v367 = vunpack.c.l.b16 %v296
    %v368 = vunpack.c.l.b16 %v297
    %v369 = vunpack.c.l.b16 %v298
    %v370 = vunpack.c.l.b16 %v299
    %v371 = vunpack.c.l.b16 %v300
    %v372 = vunpack.c.l.b16 %v301
    %v373 = vunpack.c.l.b16 %v302
    %v374 = vunpack.c.l.b16 %v303
    %v375 = vunpack.c.l.b16 %v304
    %v376 = vunpack.c.l.b16 %v305
    %v377 = vunpack.c.l.b16 %v306
    %v378 = vunpack.c.l.b16 %v307
    %v379 = vunpack.c.l.b16 %v308
    %v380 = vunpack.c.l.b16 %v309
    %v381 = vunpack.c.l.b16 %v310
    %v382 = vunpack.c.l.b16 %v311
    %v383 = vunpack.c.l.b16 %v312
    %v384 = vunpack.c.l.b16 %v313
    %v385 = vunpack.c.l.b16 %v314
    %v386 = vunpack.c.l.b16 %v315
    %v387 = vunpack.c.l.b16 %v316
    %v388 = vunpack.c.l.b16 %v317
    %v389 = vunpack.c.l.b16 %v318
    %v390 = vunpack.c.l.b16 %v319
    %v391 = vunpack.c.l.b16 %v320
    %v392 = vunpack.c.l.b16 %v321
    %v393 = vpack.c.b16 %v362, %v361
    %v394 = vpack.c.b16 %v364, %v363
    %v395 = vpack.c.b16 %v366, %v365
    %v396 = vpack.c.b16 %v368, %v367
    %v397 = vpack.c.b16 %v370, %v369
    %v398 = vpack.c.b16 %v372, %v371
    %v399 = vpack.c.b16 %v374, %v373
    %v400 = vpack.c.b16 %v376, %v375
    %v401 = vpack.c.b16 %v378, %v377
    %v402 = vpack.c.b16 %v380, %v379
    %v403 = vpack.c.b16 %v382, %v381
    %v404 = vpack.c.b16 %v384, %v383
    %v405 = vpack.c.b16 %v386, %v385
    %v406 = vpack.c.b16 %v388, %v387
    %v407 = vpack.c.b16 %v390, %v389
    %v408 = vpack.c.b16 %v392, %v391
    %425 = vmatprep.subr.bf16.mxu0 0
    %426 = vmatpush1.bf16.msra.mxu0 %v393
    %427 = vmatprep.subr.bf16.mxu0 0
    %428 = vmatpush1.bf16.msra.mxu0 %v394
    %429 = vmatprep.subr.bf16.mxu0 0
    %430 = vmatpush1.bf16.msra.mxu0 %v395
    %431 = vmatprep.subr.bf16.mxu0 0
    %432 = vmatpush1.bf16.msra.mxu0 %v396
    %433 = vmatprep.subr.bf16.mxu0 0
    %434 = vmatpush1.bf16.msra.mxu0 %v397
    %435 = vmatprep.subr.bf16.mxu0 0
    %436 = vmatpush1.bf16.msra.mxu0 %v398
    %437 = vmatprep.subr.bf16.mxu0 0
    %438 = vmatpush1.bf16.msra.mxu0 %v399
    %439 = vmatprep.subr.bf16.mxu0 0
    %440 = vmatpush1.bf16.msra.mxu0 %v400
    %441 = vmatprep.subr.bf16.mxu0 0
    %442 = vmatpush1.bf16.msra.mxu0 %v401
    %443 = vmatprep.subr.bf16.mxu0 0
    %444 = vmatpush1.bf16.msra.mxu0 %v402
    %445 = vmatprep.subr.bf16.mxu0 0
    %446 = vmatpush1.bf16.msra.mxu0 %v403
    %447 = vmatprep.subr.bf16.mxu0 0
    %448 = vmatpush1.bf16.msra.mxu0 %v404
    %449 = vmatprep.subr.bf16.mxu0 0
    %450 = vmatpush1.bf16.msra.mxu0 %v405
    %451 = vmatprep.subr.bf16.mxu0 0
    %452 = vmatpush1.bf16.msra.mxu0 %v406
    %453 = vmatprep.subr.bf16.mxu0 0
    %454 = vmatpush1.bf16.msra.mxu0 %v407
    %455 = vmatprep.subr.bf16.mxu0 0
    %456 = vmatpush1.bf16.msra.mxu0 %v408
    %457 = vmatprep.mubr.bf16.mxu0 %v289
    %458 = vmatmul.mubr.bf16.gmra.mrb[0].mxu0 %v288
    %v459 = vpop.f32.mrb[0].mxu0
    %v460 = vadd.f32 %v327, %v459
    %v461 = vpop.f32.mrb[0].mxu0
    %v462 = vpop.f32.mrb[0].mxu0
    %v463 = vpop.f32.mrb[0].mxu0
    %464 = vdwg.mxu0
    %v465 = vmax.f32 %v460, 0.0
    %v466 = vld [vmem:[%s5] sm:$0x1]
    %v467 = vpack.c.bf16 %v465, %v465
    %s468 = sld [smem:[#allocation2]]
    %v469 = vstv %s468
    %470 = vmatprep.subr.bf16.mxu0 0
    %471 = vmatpush1.bf16.xpose.msra.mxu0 %v467
    %472 = vmatprep.subr.bf16.mxu0 0
    %473 = vmatpush1.bf16.xpose.msra.mxu0 0
    %474 = vmatprep.subr.bf16.mxu0 0
    %475 = vmatpush1.bf16.xpose.msra.mxu0 0
    %476 = vmatprep.subr.bf16.mxu0 0
    %477 = vmatpush1.bf16.xpose.msra.mxu0 0
    %478 = vmatprep.subr.bf16.mxu0 0
    %479 = vmatpush1.bf16.xpose.msra.mxu0 0
    %480 = vmatprep.subr.bf16.mxu0 0
    %481 = vmatpush1.bf16.xpose.msra.mxu0 0
    %482 = vmatprep.subr.bf16.mxu0 0
    %483 = vmatpush1.bf16.xpose.msra.mxu0 0
    %484 = vmatprep.subr.bf16.mxu0 0
    %485 = vmatpush1.bf16.xpose.msra.mxu0 0
    %486 = vmatprep.subr.bf16.mxu0 0
    %487 = vmatpush1.bf16.xpose.msra.mxu0 0
    %488 = vmatprep.subr.bf16.mxu0 0
    %489 = vmatpush1.bf16.xpose.msra.mxu0 0
    %490 = vmatprep.subr.bf16.mxu0 0
    %491 = vmatpush1.bf16.xpose.msra.mxu0 0
    %492 = vmatprep.subr.bf16.mxu0 0
    %493 = vmatpush1.bf16.xpose.msra.mxu0 0
    %494 = vmatprep.subr.bf16.mxu0 0
    %495 = vmatpush1.bf16.xpose.msra.mxu0 0
    %496 = vmatprep.subr.bf16.mxu0 0
    %497 = vmatpush1.bf16.xpose.msra.mxu0 0
    %498 = vmatprep.subr.bf16.mxu0 0
    %499 = vmatpush1.bf16.xpose.msra.mxu0 0
    %500 = vmatprep.subr.bf16.mxu0 0
    %501 = vmatpush1.bf16.xpose.msra.mxu0 0
    %502 = vmatprep.mubr.bf16.mxu0 0
    %503 = vmatmul.mubr.bf16.gmra.mrb[0].mxu0 %v466
    %v504 = vpop.f32.mrb[0].mxu0
    %v505 = vadd.f32 %v469, %v504
    %v506 = vpop.f32.mrb[0].mxu0
    %v507 = vpop.f32.mrb[0].mxu0
    %v508 = vpop.f32.mrb[0].mxu0
    %509 = vdwg.mxu0
    %v510 = vxor.u32 %v505, 2147483648
    %v511 = vmul.f32 %v510, 1.442695
    %v512 = vpow.pop %v511
    %v513 = vadd.f32 %v512, 1.0
    %v514 = vrcp.pop %v513
    %v515 = vmul.f32 1.0, %v514
    %vm516 = vcmask 57344
    %517 = vst.msk [vmem:[#allocation9] sm:$0x1] %vm516, %v515
    // Predicated region
    $region42: #{tpu_custom_call.1} parent=1 // pred_check
      _
    $region43: #{tpu_custom_call.1} parent=1 // pred_check_branch
      %519 = sbr.rel (0) target = $region45
    $region44: #{tpu_custom_call.1} parent=1 // pred_region
      %s521 = ssub.s32 16, 16
      %522 = vsyncadd [#allocation5], %s521
      %s524 = sshll.u32 [#allocation9], 4
      %s525 = int_to_ptr.vmem [resolvable:$true] %s524
      %527 = dma.vmem_to_hbm [thread:$0]  %s525, 16, %s7, [#allocation5]
    $region45: #{tpu_custom_call.1} parent=1 // pred_fallthru
      _
    // Predicated region
    $region46: #{tpu_custom_call.1} parent=1 // pred_check
      _
    $region47: #{tpu_custom_call.1} parent=1 // pred_check_branch
      %529 = sbr.rel (0) target = $region49
    $region48: #{tpu_custom_call.1} parent=1 // pred_region
      %530 = dma.done [#allocation5], 16
    $region49: #{tpu_custom_call.1} parent=1 // pred_fallthru
      _
    %531 = vsyncpa [#allocation4], 1
    %532 = vsyncpa [#allocation7], 1
    %533 = vsyncpa [#allocation5], 1

</llo_original>
